<compile_context>
chip_gen: v7x
topology: tpu7x:2x2x1
jax: 0.10.0
libtpu: 0.0.40
codegen_flags: <defaults>
</compile_context>

<pallas_src>
import functools

import jax
import jax.numpy as jnp
from jax.experimental import pallas as pl
from jax.experimental.pallas import tpu as pltpu


def _block_loss(x, t, *, gamma, w0, w1, ignore_index, valid_extra=None):
    """Per-pixel focal loss for one block.

    x: (C, ROWS, 128) f32 logits; t: (ROWS, 128) int32 class indices.
    valid_extra: optional (ROWS, 128) bool mask (ragged-tail rows).
    Returns (ROWS, 128) f32 per-pixel loss (0 where invalid / ignored).
    """
    # Numerically stable log-sum-exp over the channel (leading) axis:
    # dense VPU maxes/adds over C full vreg slabs, EUP exp/log.
    m = jnp.max(x, axis=0)                                   # (R, 128)
    lse = m + jnp.log(jnp.sum(jnp.exp(x - m[None]), axis=0))  # (R, 128)

    # True-class logit via dense masked select (no O(C) sparse one-hot loop).
    ch = jax.lax.broadcasted_iota(jnp.int32, x.shape, 0)      # (C, R, 128)
    xt = jnp.sum(jnp.where(ch == t[None], x, 0.0), axis=0)    # (R, 128)

    valid = t != ignore_index
    if valid_extra is not None:
        valid = jnp.logical_and(valid, valid_extra)

    logpt = jnp.where(valid, lse - xt, 0.0)   # cross_entropy zeroes ignored
    pt = jnp.exp(-logpt)
    one_m_pt = jnp.maximum(1.0 - pt, 0.0)

    g = float(gamma)
    if g == int(g) and 0.0 <= g <= 8.0:
        # Integer gamma (default 2.0): plain VPU multiplies.
        focal = jnp.ones_like(one_m_pt)
        for _ in range(int(g)):
            focal = focal * one_m_pt
    else:
        focal = jnp.power(one_m_pt, g)

    tf = t.astype(jnp.float32)
    wfac = w0 + (w1 - w0) * tf
    return focal * logpt * wfac


def _focal_reduce_kernel(x_ref, t_ref, out_ref, *, gamma, w0, w1,
                         ignore_index, rows, num_rows, need_tail_mask):
    """'mean' / 'sum' path: accumulate per-batch (1,128) lane partials."""
    j = pl.program_id(1)

    @pl.when(j == 0)
    def _():
        out_ref[...] = jnp.zeros_like(out_ref)

    x = x_ref[0].astype(jnp.float32)          # (C, ROWS, 128)
    t = t_ref[0]                              # (ROWS, 128) int32

    vmask = None
    if need_tail_mask:
        riota = jax.lax.broadcasted_iota(jnp.int32, t.shape, 0)
        vmask = (j * rows + riota) < num_rows

    loss = _block_loss(x, t, gamma=gamma, w0=w0, w1=w1,
                       ignore_index=ignore_index, valid_extra=vmask)
    # Row reduce (sublane/XLU, idle slot) -> tiny (1,1,128) accumulator that
    # stays resident in VMEM across the row-block axis.
    out_ref[...] += jnp.sum(loss, axis=0, keepdims=True)[None]


def _focal_map_kernel(x_ref, t_ref, o_ref, *, gamma, w0, w1,
                      ignore_index, rows, num_rows, need_tail_mask):
    """'none' path: write the per-pixel loss map block-by-block (dense vst)."""
    j = pl.program_id(1)
    x = x_ref[0].astype(jnp.float32)
    t = t_ref[0]

    vmask = None
    if need_tail_mask:
        riota = jax.lax.broadcasted_iota(jnp.int32, t.shape, 0)
        vmask = (j * rows + riota) < num_rows

    o_ref[0] = _block_loss(x, t, gamma=gamma, w0=w0, w1=w1,
                           ignore_index=ignore_index, valid_extra=vmask)


def focal_loss_pallas(inputs, target, weight=(1.0, 1.0), gamma=2.0,
                      ignore_index=-100, reduction='mean',
                      max_block_rows=None):
    """inputs: (N, C, *spatial) logits; target: (N, *spatial) int class ids."""
    n, c = inputs.shape[0], inputs.shape[1]
    spatial = inputs.shape[2:]
    assert target.shape == (n,) + tuple(spatial), (target.shape, inputs.shape)

    hw = 1
    for s in spatial:
        hw *= int(s)

    x = inputs.reshape(n, c, hw)
    t = target.reshape(n, hw).astype(jnp.int32)

    # Lane tail: pad only up to the next multiple of 128 (target gets
    # ignore_index so padded lanes contribute exactly zero loss).
    hw128 = ((hw + 127) // 128) * 128
    if hw128 != hw:
        x = jnp.pad(x, ((0, 0), (0, 0), (0, hw128 - hw)))
        t = jnp.pad(t, ((0, 0), (0, hw128 - hw)), constant_values=ignore_index)

    num_rows = hw128 // 128
    x = x.reshape(n, c, num_rows, 128)       # zero-copy when hw % 128 == 0
    t = t.reshape(n, num_rows, 128)

    # Rows per block: ~2 MiB of f32 logits per step, multiple of 8, capped.
    rows_budget = (2 << 20) // (c * 128 * 4)
    rows_budget = max(8, min(2048, (rows_budget // 8) * 8))
    if max_block_rows is not None:
        rows_budget = max(8, (min(rows_budget, int(max_block_rows)) // 8) * 8)

    if num_rows <= rows_budget:
        rows = num_rows                       # single block (= full dim, OK)
        grid_j = 1
    else:
        rows = rows_budget                    # multiple of 8
        grid_j = pl.cdiv(num_rows, rows)
    need_tail_mask = (grid_j * rows) > num_rows   # ragged last row-block

    grid = (n, grid_j)
    w0, w1 = float(weight[0]), float(weight[1])
    gamma = float(gamma)
    ignore_index = int(ignore_index)

    in_specs = [
        pl.BlockSpec((1, c, rows, 128), lambda i, j: (i, 0, j, 0)),
        pl.BlockSpec((1, rows, 128), lambda i, j: (i, j, 0)),
    ]

    n_px = n * hw128
    cost = pl.CostEstimate(
        flops=int(n_px * (12 * c + 30)),
        transcendentals=int(n_px * (c + 2)),
        bytes_accessed=int(x.size * x.dtype.itemsize + t.size * 4
                           + n_px * 4),
    )
    cparams_common = dict(vmem_limit_bytes=32 * 1024 * 1024)

    if reduction == 'none':
        kernel = functools.partial(
            _focal_map_kernel, gamma=gamma, w0=w0, w1=w1,
            ignore_index=ignore_index, rows=rows, num_rows=num_rows,
            need_tail_mask=need_tail_mask)
        r_total = grid_j * rows
        out = pl.pallas_call(
            kernel,
            out_shape=jax.ShapeDtypeStruct((n, r_total, 128), jnp.float32),
            grid_spec=pltpu.PrefetchScalarGridSpec(
                num_scalar_prefetch=0,
                grid=grid,
                in_specs=in_specs,
                out_specs=pl.BlockSpec((1, rows, 128), lambda i, j: (i, j, 0)),
            ),
            compiler_params=pltpu.CompilerParams(
                dimension_semantics=("parallel", "parallel"),
                **cparams_common),
            cost_estimate=cost,
        )(x, t)
        return out.reshape(n, r_total * 128)[:, :hw].reshape(target.shape)

    if reduction == 'mean':
        # torch: cross_entropy(reduction='none') then .mean() -> counts all
        # pixels (including ignore_index ones) in the denominator.
        scale = 1.0 / float(n * hw)
    elif reduction == 'sum':
        scale = 1.0
    else:
        raise ValueError(f"unknown reduction: {reduction}")

    kernel = functools.partial(
        _focal_reduce_kernel, gamma=gamma, w0=w0, w1=w1,
        ignore_index=ignore_index, rows=rows, num_rows=num_rows,
        need_tail_mask=need_tail_mask)
    partials = pl.pallas_call(
        kernel,
        out_shape=jax.ShapeDtypeStruct((n, 1, 128), jnp.float32),
        grid_spec=pltpu.PrefetchScalarGridSpec(
            num_scalar_prefetch=0,
            grid=grid,
            in_specs=in_specs,
            # Per-batch accumulator block, resident across the row-block axis.
            out_specs=pl.BlockSpec((1, 1, 128), lambda i, j: (i, 0, 0)),
        ),
        compiler_params=pltpu.CompilerParams(
            dimension_semantics=("parallel", "arbitrary"),
            **cparams_common),
        cost_estimate=cost,
    )(x, t)
    # Tiny final cross-lane / cross-batch reduce in the wrapper.
    return jnp.sum(partials) * scale


class FocalLoss:
    """Mirrors the PyTorch FocalLoss module (forward pass)."""

    def __init__(self, weight=None, gamma=2.0, ignore_index=-100,
                 reduction='mean'):
        if weight is None:
            weight = [1.0, 1.0]
        self.weight = weight
        self.gamma = gamma
        self.ignore_index = ignore_index
        self.reduction = reduction

    def __call__(self, inputs, target):
        return focal_loss_pallas(inputs, target, self.weight, self.gamma,
                                 self.ignore_index, self.reduction)


def _focal_ref(logits, target, weight, gamma, ignore_index, reduction):
    """Pure-JAX reference replicating the PyTorch math."""
    x = logits.astype(jnp.float32)
    lse = jax.nn.logsumexp(x, axis=1)
    t_safe = jnp.where(target == ignore_index, 0, target)
    xt = jnp.take_along_axis(x, t_safe[:, None, ...], axis=1)[:, 0]
    valid = target != ignore_index
    logpt = jnp.where(valid, lse - xt, 0.0)
    pt = jnp.exp(-logpt)
    focal = jnp.maximum(1.0 - pt, 0.0) ** gamma
    tf = target.astype(jnp.float32)
    wfac = weight[0] * (1.0 - tf) + weight[1] * tf
    loss = focal * logpt * wfac
    if reduction == 'mean':
        return loss.mean()
    if reduction == 'sum':
        return loss.sum()
    return loss


if __name__ == "__main__":
    key = jax.random.PRNGKey(0)
    weight = [0.3, 0.7]
    gamma = 2.0

    # --- Case 1: aligned spatial (HW multiple of 128), default shapes. -----
    k1, k2, k3 = jax.random.split(key, 3)
    N, C, H, W = 2, 4, 16, 16
    logits = jax.random.normal(k1, (N, C, H, W), dtype=jnp.float32)
    target = jax.random.randint(k2, (N, H, W), 0, C, dtype=jnp.int32)
    target = jnp.where(jax.random.uniform(k3, (N, H, W)) < 0.1, -100, target)

    loss = jax.block_until_ready(FocalLoss(weight, gamma)(logits, target))
    ref = _focal_ref(logits, target, weight, gamma, -100, 'mean')
    assert jnp.allclose(loss, ref, atol=1e-5, rtol=1e-5), (loss, ref)

    loss_s = jax.block_until_ready(
        FocalLoss(weight, gamma, reduction='sum')(logits, target))
    ref_s = _focal_ref(logits, target, weight, gamma, -100, 'sum')
    assert jnp.allclose(loss_s, ref_s, atol=1e-3, rtol=1e-5), (loss_s, ref_s)

    loss_m = jax.block_until_ready(
        FocalLoss(weight, gamma, reduction='none')(logits, target))
    ref_m = _focal_ref(logits, target, weight, gamma, -100, 'none')
    assert loss_m.shape == ref_m.shape
    assert jnp.allclose(loss_m, ref_m, atol=1e-5, rtol=1e-5)

    # --- Case 2: unaligned spatial (HW not a multiple of 128). -------------
    k1, k2, k3 = jax.random.split(jax.random.PRNGKey(1), 3)
    N2, C2, H2, W2 = 2, 5, 10, 13
    logits2 = jax.random.normal(k1, (N2, C2, H2, W2), dtype=jnp.float32)
    target2 = jax.random.randint(k2, (N2, H2, W2), 0, C2, dtype=jnp.int32)
    target2 = jnp.where(jax.random.uniform(k3, (N2, H2, W2)) < 0.1,
                        -100, target2)

    l2 = jax.block_until_ready(FocalLoss(weight, gamma)(logits2, target2))
    r2 = _focal_ref(logits2, target2, weight, gamma, -100, 'mean')
    assert jnp.allclose(l2, r2, atol=1e-5, rtol=1e-5), (l2, r2)

    l2m = jax.block_until_ready(
        FocalLoss(weight, gamma, reduction='none')(logits2, target2))
    r2m = _focal_ref(logits2, target2, weight, gamma, -100, 'none')
    assert jnp.allclose(l2m, r2m, atol=1e-5, rtol=1e-5)

    # --- Case 3: multi-block grid with ragged last row-block (forced). -----
    k1, k2, k3 = jax.random.split(jax.random.PRNGKey(2), 3)
    N3, C3, H3, W3 = 1, 3, 16, 72          # HW = 1152 -> 9 rows of 128
    logits3 = jax.random.normal(k1, (N3, C3, H3, W3), dtype=jnp.float32)
    target3 = jax.random.randint(k2, (N3, H3, W3), 0, C3, dtype=jnp.int32)
    target3 = jnp.where(jax.random.uniform(k3, (N3, H3, W3)) < 0.1,
                        -100, target3)

    l3 = jax.block_until_ready(
        focal_loss_pallas(logits3, target3, weight, gamma, -100, 'sum',
                          max_block_rows=8))
    r3 = _focal_ref(logits3, target3, weight, gamma, -100, 'sum')
    assert jnp.allclose(l3, r3, atol=1e-3, rtol=1e-5), (l3, r3)

    l3m = jax.block_until_ready(
        focal_loss_pallas(logits3, target3, weight, gamma, -100, 'none',
                          max_block_rows=8))
    r3m = _focal_ref(logits3, target3, weight, gamma, -100, 'none')
    assert jnp.allclose(l3m, r3m, atol=1e-5, rtol=1e-5)

    print("KERNEL_OK")
</pallas_src>

<mosaic_0001>
module attributes {stable_mosaic.version = 11 : i64} {
  func.func @_focal_reduce_kernel(%arg0: i32, %arg1: i32, %arg2: memref<1x4x2x128xf32, #tpu.memory_space<vmem>>, %arg3: memref<1x2x128xi32, #tpu.memory_space<vmem>>, %arg4: memref<1x1x128xf32, #tpu.memory_space<vmem>>) attributes {dimension_semantics = [#tpu.dimension_semantics<parallel>, #tpu.dimension_semantics<arbitrary>], iteration_bounds = array<i64: 2, 1>, scalar_prefetch = 0 : i64, scratch_operands = 0 : i64, tpu.core_type = #tpu.core_type<tc>, window_params = [{transform_indices = @transform_0, window_bounds = array<i64: 1, 4, 2, 128>}, {transform_indices = @transform_1, window_bounds = array<i64: 1, 2, 128>}, {transform_indices = @transform_2, window_bounds = array<i64: 1, 1, 128>}]} {
    %c0_i32 = arith.constant 0 : i32
    %0 = arith.cmpi eq, %arg1, %c0_i32 : i32
    %1 = arith.extui %0 : i1 to i32
    %c0_i32_0 = arith.constant 0 : i32
    %2 = arith.cmpi ne, %1, %c0_i32_0 : i32
    scf.if %2 {
      %cst_24 = arith.constant 0.000000e+00 : f32
      %50 = vector.broadcast %cst_24 : f32 to vector<1x1x128xf32>
      %c0_25 = arith.constant 0 : index
      %c0_26 = arith.constant 0 : index
      %c0_27 = arith.constant 0 : index
      %51 = vector.load %arg4[%c0_25, %c0_26, %c0_27] : memref<1x1x128xf32, #tpu.memory_space<vmem>>, vector<1x1x128xf32>
      tpu.vector_store %arg4[%c0_25, %c0_26, %c0_27], %50 {strides = array<i32>} : memref<1x1x128xf32, #tpu.memory_space<vmem>>, vector<1x1x128xf32>,
    } else {
    }
    %c0 = arith.constant 0 : index
    %c0_1 = arith.constant 0 : index
    %c0_2 = arith.constant 0 : index
    %c0_3 = arith.constant 0 : index
    %3 = vector.load %arg2[%c0, %c0_1, %c0_2, %c0_3] : memref<1x4x2x128xf32, #tpu.memory_space<vmem>>, vector<1x4x2x128xf32>
    %4 = vector.shape_cast %3 : vector<1x4x2x128xf32> to vector<4x2x128xf32>
    %c0_4 = arith.constant 0 : index
    %c0_5 = arith.constant 0 : index
    %c0_6 = arith.constant 0 : index
    %5 = vector.load %arg3[%c0_4, %c0_5, %c0_6] : memref<1x2x128xi32, #tpu.memory_space<vmem>>, vector<1x2x128xi32>
    %6 = vector.shape_cast %5 : vector<1x2x128xi32> to vector<2x128xi32>
    %cst = arith.constant dense<0xFF800000> : vector<2x128xf32>
    %7 = vector.multi_reduction <maximumf>, %4, %cst [0] : vector<4x2x128xf32> to vector<2x128xf32>
    %8 = vector.shape_cast %7 : vector<2x128xf32> to vector<1x2x128xf32>
    %9 = vector.broadcast %8 : vector<1x2x128xf32> to vector<4x2x128xf32>
    %10 = arith.subf %4, %9 : vector<4x2x128xf32>
    %11 = math.exp %10 : vector<4x2x128xf32>
    %cst_7 = arith.constant dense<0.000000e+00> : vector<2x128xf32>
    %12 = vector.multi_reduction <add>, %11, %cst_7 [0] : vector<4x2x128xf32> to vector<2x128xf32>
    %13 = math.log %12 : vector<2x128xf32>
    %14 = arith.addf %7, %13 : vector<2x128xf32>
    %15 = tpu.iota {dimensions = array<i32: 0>} : vector<4x2x128xi32>
    %16 = vector.shape_cast %6 : vector<2x128xi32> to vector<1x2x128xi32>
    %17 = vector.broadcast %16 : vector<1x2x128xi32> to vector<4x2x128xi32>
    %18 = arith.cmpi eq, %15, %17 : vector<4x2x128xi32>
    %cst_8 = arith.constant 0.000000e+00 : f32
    %19 = vector.broadcast %cst_8 : f32 to vector<4x2x128xf32>
    %20 = arith.select %18, %4, %19 : vector<4x2x128xi1>, vector<4x2x128xf32>
    %cst_9 = arith.constant dense<0.000000e+00> : vector<2x128xf32>
    %21 = vector.multi_reduction <add>, %20, %cst_9 [0] : vector<4x2x128xf32> to vector<2x128xf32>
    %c-100_i32 = arith.constant -100 : i32
    %22 = vector.broadcast %c-100_i32 : i32 to vector<2x128xi32>
    %23 = arith.cmpi ne, %6, %22 : vector<2x128xi32>
    %24 = arith.subf %14, %21 : vector<2x128xf32>
    %cst_10 = arith.constant 0.000000e+00 : f32
    %25 = vector.broadcast %cst_10 : f32 to vector<2x128xf32>
    %26 = arith.select %23, %24, %25 : vector<2x128xi1>, vector<2x128xf32>
    %cst_11 = arith.constant 0.000000e+00 : f32
    %27 = vector.broadcast %cst_11 : f32 to vector<2x128xf32>
    %28 = arith.subf %27, %26 : vector<2x128xf32>
    %29 = math.exp %28 : vector<2x128xf32>
    %cst_12 = arith.constant 1.000000e+00 : f32
    %30 = vector.broadcast %cst_12 : f32 to vector<2x128xf32>
    %31 = arith.subf %30, %29 : vector<2x128xf32>
    %cst_13 = arith.constant 0.000000e+00 : f32
    %32 = vector.broadcast %cst_13 : f32 to vector<2x128xf32>
    %33 = arith.maximumf %31, %32 : vector<2x128xf32>
    %cst_14 = arith.constant 1.000000e+00 : f32
    %34 = vector.broadcast %cst_14 : f32 to vector<2x128xf32>
    %35 = arith.mulf %34, %33 : vector<2x128xf32>
    %36 = arith.mulf %35, %33 : vector<2x128xf32>
    %37 = arith.sitofp %6 : vector<2x128xi32> to vector<2x128xf32>
    %cst_15 = arith.constant 4.000000e-01 : f32
    %38 = vector.broadcast %cst_15 : f32 to vector<2x128xf32>
    %39 = arith.mulf %38, %37 : vector<2x128xf32>
    %cst_16 = arith.constant 3.000000e-01 : f32
    %40 = vector.broadcast %cst_16 : f32 to vector<2x128xf32>
    %41 = arith.addf %40, %39 : vector<2x128xf32>
    %42 = arith.mulf %36, %26 : vector<2x128xf32>
    %43 = arith.mulf %42, %41 : vector<2x128xf32>
    %c0_17 = arith.constant 0 : index
    %c0_18 = arith.constant 0 : index
    %c0_19 = arith.constant 0 : index
    %44 = vector.load %arg4[%c0_17, %c0_18, %c0_19] : memref<1x1x128xf32, #tpu.memory_space<vmem>>, vector<1x1x128xf32>
    %cst_20 = arith.constant dense<0.000000e+00> : vector<128xf32>
    %45 = vector.multi_reduction <add>, %43, %cst_20 [0] : vector<2x128xf32> to vector<128xf32>
    %46 = vector.shape_cast %45 : vector<128xf32> to vector<1x128xf32>
    %47 = vector.shape_cast %46 : vector<1x128xf32> to vector<1x1x128xf32>
    %48 = arith.addf %44, %47 : vector<1x1x128xf32>
    %c0_21 = arith.constant 0 : index
    %c0_22 = arith.constant 0 : index
    %c0_23 = arith.constant 0 : index
    %49 = vector.load %arg4[%c0_21, %c0_22, %c0_23] : memref<1x1x128xf32, #tpu.memory_space<vmem>>, vector<1x1x128xf32>
    tpu.vector_store %arg4[%c0_21, %c0_22, %c0_23], %48 {strides = array<i32>} : memref<1x1x128xf32, #tpu.memory_space<vmem>>, vector<1x1x128xf32>,
    return
  }
  func.func @transform_0(%arg0: i32, %arg1: i32) -> (i32, i32, i32, i32) {
    %c0_i32 = arith.constant 0 : i32
    %c0_i32_0 = arith.constant 0 : i32
    %c0_i32_1 = arith.constant 0 : i32
    return %arg0, %c0_i32, %arg1, %c0_i32_0 : i32, i32, i32, i32
  }
  func.func @transform_1(%arg0: i32, %arg1: i32) -> (i32, i32, i32) {
    %c0_i32 = arith.constant 0 : i32
    %c0_i32_0 = arith.constant 0 : i32
    return %arg0, %arg1, %c0_i32 : i32, i32, i32
  }
  func.func @transform_2(%arg0: i32, %arg1: i32) -> (i32, i32, i32) {
    %c0_i32 = arith.constant 0 : i32
    %c0_i32_0 = arith.constant 0 : i32
    %c0_i32_1 = arith.constant 0 : i32
    return %arg0, %c0_i32, %c0_i32_0 : i32, i32, i32
  }
}

</mosaic_0001>

<llo_original>
// kernel: tpu_custom_call.1
$region0: #{tpu_custom_call.1}
  #allocation0 [shape = 'u32[]', space=smem, size = 0x4, offset = 0x4, fixed_abs, tag = 'smem constant byte address 0x4 - core index']
  #allocation1 [shape = 'u32[144,128]{1,0:T(1,128)}', space=vmem, size = 0x12000, scoped, tag = 'internal scratch']
  %s0 = inlined_call_operand.hbm [shape: f32[2,4,2,128], index: 0, kind: input, shape index: {}]
  %s1 = inlined_call_operand.hbm [shape: s32[2,2,128], index: 1, kind: input, shape index: {}]
  %s2 = inlined_call_operand.hbm [shape: f32[2,1,128], index: 2, kind: output, shape index: {}]
  %s3 = sld [smem:[#allocation0]]
  $region53: #{tpu_custom_call.1} parent=0
    _
  %s5 = ssub.s32 1, %s3
  %s6 = scalar_select 0, %s5, %s3
  $region1: #{tpu_custom_call.1} parent=0
    #allocation2 [shape = 'u8[8192]{0}', space=vmem, size = 0x2000, scoped, tag = 'input window, operand 0']
    #allocation3 [shape = 's32[2]{0}', space=sflag, size = 0x8, scoped, tag = 'scoped memory for tpu_custom_call.1']
    #allocation4 [shape = 's32[2]{0}', space=sflag, size = 0x8, scoped, tag = 'scoped memory for tpu_custom_call.1']
    #allocation5 [shape = 'u8[2048]{0}', space=vmem, size = 0x800, scoped, tag = 'input window, operand 1']
    #allocation6 [shape = 's32[2]{0}', space=sflag, size = 0x8, scoped, tag = 'scoped memory for tpu_custom_call.1']
    #allocation7 [shape = 'u8[1024]{0}', space=vmem, size = 0x400, scoped, tag = 'output window, operand 0']
    %7 = vsyncpa [#allocation3], 0
    %s8 = scalar_lea.sflag [#allocation3], 1
    %9 = vsyncpa %s8, 0
    %10 = vsyncpa [#allocation6], 0
    %s11 = scalar_lea.sflag [#allocation6], 1
    %12 = vsyncpa %s11, 0
    %13 = vsyncpa [#allocation4], 0
    %s14 = scalar_lea.sflag [#allocation4], 1
    %15 = vsyncpa %s14, 0
    loop: start=0, step=1, limit=4
    $region2: #{tpu_custom_call.1} parent=1 // loop_pre_header
      _
    $region3: #{tpu_custom_call.1} parent=1 // loop_header
      %s17 = sphi 0, %s21
      %p18 = scmp.ge.s32.totalorder %s17, 4
      %s24 = sphi 0, %s36
      %s25 = sphi 0, %s32
      %s26 = sphi 0, %s24
      %s27 = sphi 0, %s25
      %s28 = sphi 0, %s26
      %s29 = sphi 0, %s27
      %s41 = sphi 0, %s43
      %s44 = sphi 0, %s41
      %s45 = sphi 0, %s44
      %s61 = sphi 0, %s45
      %s69 = sphi 0, %s71
      %s72 = sphi 0, %s69
      %s73 = sphi 0, %s72
      %s89 = sphi 0, %s73
      %s95 = sphi 0, %s97
      %s98 = sphi 0, %s95
      %s99 = sphi 0, %s98
      %s115 = sphi 0, %s99
    $region4: #{tpu_custom_call.1} parent=1 // loop_header_branch
      %20 = sbr.rel (%p18) target = $region8
    $region5: #{tpu_custom_call.1} parent=1 // loop_body
      %s22 = ssub.s32 %s17, 1
      %s23 = ssub.s32 %s17, 2
      %s30 = sadd.s32 1, %s25
      %p31 = scmp.ge.s32.totalorder %s30, 1
      %s32 = scalar_select %p31, 0, %s30
      %s33 = sadd.s32 1, %s24
      %s34 = scalar_select %p31, %s33, %s24
      %p35 = scmp.ge.s32.totalorder %s34, 2
      %s36 = scalar_select %p35, 0, %s34
      %s37 = ssub.s32 %s24, %s36
      %s38 = ssub.s32 %s25, %s32
      %s39 = sor.u32 %s37, %s38
      %p40 = scmp.eq.s32.totalorder %s39, 0
      %s42 = sadd.s32 %s41, 1
      %s43 = scalar_select %p40, %s41, %s42
      %p46 = pneg %p40
      %p47 = scmp.eq.s32.totalorder %s17, 1
      %p48 = por %p46, %p47
      %p49 = scmp.ne.s32.totalorder %s41, %s44
      %p50 = scmp.eq.s32.totalorder %s17, 0
      %p51 = por %p49, %p50
      %p52 = scmp.ne.s32.totalorder %s41, %s44
      %p53 = scmp.eq.s32.totalorder %s22, 1
      %p54 = por %p52, %p53
      %p55 = scmp.ne.s32.totalorder %s44, %s45
      %p56 = scmp.eq.s32.totalorder %s22, 0
      %p57 = por %p55, %p56
      %p58 = scmp.ne.s32.totalorder %s44, %s45
      %p59 = scmp.eq.s32.totalorder %s23, 1
      %p60 = por %p58, %p59
      %p62 = scmp.ne.s32.totalorder %s45, %s61
      %p63 = scmp.eq.s32.totalorder %s23, 0
      %p64 = por %p62, %p63
      %s65 = ssub.s32 %s24, %s36
      %s66 = ssub.s32 %s25, %s32
      %s67 = sor.u32 %s65, %s66
      %p68 = scmp.eq.s32.totalorder %s67, 0
      %s70 = sadd.s32 %s69, 1
      %s71 = scalar_select %p68, %s69, %s70
      %p74 = pneg %p68
      %p75 = scmp.eq.s32.totalorder %s17, 1
      %p76 = por %p74, %p75
      %p77 = scmp.ne.s32.totalorder %s69, %s72
      %p78 = scmp.eq.s32.totalorder %s17, 0
      %p79 = por %p77, %p78
      %p80 = scmp.ne.s32.totalorder %s69, %s72
      %p81 = scmp.eq.s32.totalorder %s22, 1
      %p82 = por %p80, %p81
      %p83 = scmp.ne.s32.totalorder %s72, %s73
      %p84 = scmp.eq.s32.totalorder %s22, 0
      %p85 = por %p83, %p84
      %p86 = scmp.ne.s32.totalorder %s72, %s73
      %p87 = scmp.eq.s32.totalorder %s23, 1
      %p88 = por %p86, %p87
      %p90 = scmp.ne.s32.totalorder %s73, %s89
      %p91 = scmp.eq.s32.totalorder %s23, 0
      %p92 = por %p90, %p91
      %s93 = ssub.s32 %s24, %s36
      %p94 = scmp.eq.s32.totalorder %s93, 0
      %s96 = sadd.s32 %s95, 1
      %s97 = scalar_select %p94, %s95, %s96
      %p100 = pneg %p94
      %p101 = scmp.eq.s32.totalorder %s17, 1
      %p102 = por %p100, %p101
      %p103 = scmp.ne.s32.totalorder %s95, %s98
      %p104 = scmp.eq.s32.totalorder %s17, 0
      %p105 = por %p103, %p104
      %p106 = scmp.ne.s32.totalorder %s95, %s98
      %p107 = scmp.eq.s32.totalorder %s22, 1
      %p108 = por %p106, %p107
      %p109 = scmp.ne.s32.totalorder %s98, %s99
      %p110 = scmp.eq.s32.totalorder %s22, 0
      %p111 = por %p109, %p110
      %p112 = scmp.ne.s32.totalorder %s98, %s99
      %p113 = scmp.eq.s32.totalorder %s23, 1
      %p114 = por %p112, %p113
      %p116 = scmp.ne.s32.totalorder %s99, %s115
      %p117 = scmp.eq.s32.totalorder %s23, 0
      %p118 = por %p116, %p117
      %p119 = scmp.le.s32.totalorder 1, %s17
      %p120 = scmp.lt.s32.totalorder %s17, 3
      %p121 = pnand %p119, %p120
      %p122 = pneg %p121
      // Predicated region
      $region9: #{tpu_custom_call.1} parent=5 // pred_check
        _
      $region10: #{tpu_custom_call.1} parent=5 // pred_check_branch
        %124 = sbr.rel (%p121) target = $region12
      $region11: #{tpu_custom_call.1} parent=5 // pred_region
        %s125 = ssub.s32 %s17, 1
      $region12: #{tpu_custom_call.1} parent=5 // pred_fallthru
        _
      %p126 = scmp.lt.s32.totalorder %s17, 2
      // Predicated region
      $region13: #{tpu_custom_call.1} parent=5 // pred_check
        %p127 = pneg %p126
      $region14: #{tpu_custom_call.1} parent=5 // pred_check_branch
        %129 = sbr.rel (%p127) target = $region16
      $region15: #{tpu_custom_call.1} parent=5 // pred_region
        // Predicated region
        $region17: #{tpu_custom_call.1} parent=15 // pred_check
          %p130 = pneg %p51
        $region18: #{tpu_custom_call.1} parent=15 // pred_check_branch
          %132 = sbr.rel (%p130) target = $region20
        $region19: #{tpu_custom_call.1} parent=15 // pred_region
          %s133 = sand.u32 %s41, 1
          %s134 = scalar_lea.sflag [#allocation3], %s133
          %s135 = sand.u32 %s41, 1
          %s136 = smul.addr %s135, 8
          %s137 = scalar_lea.vmem [#allocation2], %s136
          %s139 = ssub.s32 128, 128
          %140 = vsyncadd %s134, %s139
          %s141 = smul.addr %s24, 4
          %s142 = sadd.s32 %s25, %s141
          %s143 = smul.addr %s142, 32
          %s144 = scalar_lea.hbm %s0, %s143
          %s145 = sshll.u32 %s137, 4
          %s146 = int_to_ptr.vmem [resolvable:$true] %s145
          %151 = dma.hbm_to_vmem [thread:$0]  %s144, 128, %s146, %s134, 32, 32, 2
        $region20: #{tpu_custom_call.1} parent=15 // pred_fallthru
          _
        // Predicated region
        $region21: #{tpu_custom_call.1} parent=15 // pred_check
          %p152 = pneg %p79
        $region22: #{tpu_custom_call.1} parent=15 // pred_check_branch
          %154 = sbr.rel (%p152) target = $region24
        $region23: #{tpu_custom_call.1} parent=15 // pred_region
          %s155 = sand.u32 %s69, 1
          %s156 = scalar_lea.sflag [#allocation6], %s155
          %s157 = sand.u32 %s69, 1
          %s158 = smul.addr %s157, 2
          %s159 = scalar_lea.vmem [#allocation5], %s158
          %s161 = ssub.s32 32, 32
          %162 = vsyncadd %s156, %s161
          %s163 = sadd.s32 %s25, %s24
          %s164 = smul.addr %s163, 32
          %s165 = scalar_lea.hbm %s1, %s164
          %s167 = sshll.u32 %s159, 4
          %s168 = int_to_ptr.vmem [resolvable:$true] %s167
          %170 = dma.hbm_to_vmem [thread:$0]  %s165, 32, %s168, %s156
        $region24: #{tpu_custom_call.1} parent=15 // pred_fallthru
          _
      $region16: #{tpu_custom_call.1} parent=5 // pred_fallthru
        _
      %p171 = scmp.le.s32.totalorder 1, %s17
      %p172 = scmp.lt.s32.totalorder %s17, 3
      %p173 = pnand %p171, %p172
      %p174 = pneg %p173
      // Predicated region
      $region25: #{tpu_custom_call.1} parent=5 // pred_check
        _
      $region26: #{tpu_custom_call.1} parent=5 // pred_check_branch
        %176 = sbr.rel (%p173) target = $region28
      $region27: #{tpu_custom_call.1} parent=5 // pred_region
        %s177 = ssub.s32 %s17, 1
        %s178 = sand.u32 %s44, 1
        %s179 = scalar_lea.sflag [#allocation3], %s178
        %s180 = sand.u32 %s44, 1
        %s181 = smul.addr %s180, 8
        %s182 = scalar_lea.vmem [#allocation2], %s181
        // Predicated region
        $region29: #{tpu_custom_call.1} parent=27 // pred_check
          %p183 = pneg %p57
        $region30: #{tpu_custom_call.1} parent=27 // pred_check_branch
          %185 = sbr.rel (%p183) target = $region32
        $region31: #{tpu_custom_call.1} parent=27 // pred_region
          %186 = dma.done %s179, 128
        $region32: #{tpu_custom_call.1} parent=27 // pred_fallthru
          _
        %s187 = sand.u32 %s72, 1
        %s188 = scalar_lea.sflag [#allocation6], %s187
        %s189 = sand.u32 %s72, 1
        %s190 = smul.addr %s189, 2
        %s191 = scalar_lea.vmem [#allocation5], %s190
        // Predicated region
        $region33: #{tpu_custom_call.1} parent=27 // pred_check
          %p192 = pneg %p85
        $region34: #{tpu_custom_call.1} parent=27 // pred_check_branch
          %194 = sbr.rel (%p192) target = $region36
        $region35: #{tpu_custom_call.1} parent=27 // pred_region
          %195 = dma.done %s188, 32
        $region36: #{tpu_custom_call.1} parent=27 // pred_fallthru
          _
        %s196 = sand.u32 %s44, 1
        %s197 = scalar_lea.sflag [#allocation3], %s196
        %s198 = sand.u32 %s44, 1
        %s199 = smul.addr %s198, 8
        %s200 = scalar_lea.vmem [#allocation2], %s199
        %p201 = pneg %p57
        %p202 = pneg %p54
        %s203 = sand.u32 %s72, 1
        %s204 = scalar_lea.sflag [#allocation6], %s203
        %s205 = sand.u32 %s72, 1
        %s206 = smul.addr %s205, 2
        %s207 = scalar_lea.vmem [#allocation5], %s206
        %p208 = pneg %p85
        %p209 = pneg %p82
        %p210 = pneg %p111
        %p211 = pneg %p108
        %s212 = sand.u32 %s98, 1
        %s213 = scalar_lea.sflag [#allocation4], %s212
        %s214 = sand.u32 %s98, 1
        %s215 = scalar_lea.vmem [#allocation7], %s214
        %p216 = scmp.eq.s32.totalorder %s27, 0
        // Predicated region
        $region37: #{tpu_custom_call.1} parent=27 // pred_check
          %p217 = pneg %p216
        $region38: #{tpu_custom_call.1} parent=27 // pred_check_branch
          %219 = sbr.rel (%p217) target = $region40
        $region39: #{tpu_custom_call.1} parent=27 // pred_region
          %220 = vst [vmem:[%s215] sm:$0x1] 0.0
        $region40: #{tpu_custom_call.1} parent=27 // pred_fallthru
          _
        %v221 = vld [vmem:[%s182] sm:$0x3]
        %v222 = vld [vmem:[%s182 + $0x2] sm:$0x3]
        %v223 = vld [vmem:[%s182 + $0x4] sm:$0x3]
        %v224 = vld [vmem:[%s182 + $0x6] sm:$0x3]
        %v225 = vld [vmem:[%s191] sm:$0x3]
        %vm226 = vcmask 1041408
        %v227 = vsel %vm226, %v221, -inf
        %v228 = vsel %vm226, %v222, -inf
        %v229 = vsel %vm226, %v223, -inf
        %v230 = vsel %vm226, %v224, -inf
        %v231 = vmax.f32 %v227, %v228
        %v232 = vmax.f32 %v229, %v230
        %v233 = vmax.f32 %v231, %v232
        %v234 = vsub.f32 %v221, %v233
        %v235 = vsub.f32 %v222, %v233
        %v236 = vsub.f32 %v223, %v233
        %v237 = vsub.f32 %v224, %v233
        %v238 = vmul.f32 %v234, 1.442695
        %v239 = vpow.pop %v238
        %v240 = vmul.f32 %v235, 1.442695
        %v241 = vpow.pop %v240
        %v242 = vmul.f32 %v236, 1.442695
        %v243 = vpow.pop %v242
        %v244 = vmul.f32 %v237, 1.442695
        %v245 = vpow.pop %v244
        %v246 = vsel %vm226, %v239, 0.0
        %v247 = vsel %vm226, %v241, 0.0
        %v248 = vadd.f32 %v246, %v247
        %v249 = vsel %vm226, %v243, 0.0
        %v250 = vadd.f32 %v248, %v249
        %v251 = vsel %vm226, %v245, 0.0
        %v252 = vadd.f32 %v250, %v251
        %v253 = vlog2.pop %v252
        %v254 = vmul.f32 %v253, 0.6931472
        %v255 = vadd.f32 %v233, %v254
        %vm256 = vcmp.eq.s32.totalorder %v225, 0
        %vm257 = vcmp.eq.s32.totalorder %v225, 1
        %vm258 = vcmp.eq.s32.totalorder %v225, 2
        %vm259 = vcmp.eq.s32.totalorder %v225, 3
        %v260 = vsel %vm256, %v221, 0.0
        %v261 = vsel %vm257, %v222, 0.0
        %v262 = vsel %vm258, %v223, 0.0
        %v263 = vsel %vm259, %v224, 0.0
        %v264 = vsel %vm226, %v260, 0.0
        %v265 = vsel %vm226, %v261, 0.0
        %v266 = vadd.f32 %v264, %v265
        %v267 = vsel %vm226, %v262, 0.0
        %v268 = vadd.f32 %v266, %v267
        %v269 = vsel %vm226, %v263, 0.0
        %v270 = vadd.f32 %v268, %v269
        %vm271 = vcmp.ne.s32.totalorder %v225, 4294967196
        %v272 = vsub.f32 %v255, %v270
        %v273 = vsel %vm271, %v272, 0.0
        %v274 = vsub.f32 0.0, %v273
        %v275 = vmul.f32 %v274, 1.442695
        %v276 = vpow.pop %v275
        %v277 = vsub.f32 1.0, %v276
        %v278 = vmax.f32 %v277, 0.0
        %v279 = vmul.f32 %v278, %v278
        %v280 = vcvt.s32.f32 %v225
        %v281 = vmul.f32 %v280, 0.4
        %v282 = vadd.f32 %v281, 0.3
        %v283 = vmul.f32 %v279, %v273
        %v284 = vmul.f32 %v283, %v282
        %v285 = vld [vmem:[%s215] sm:$0x1]
        %v286 = vsel %vm226, %v284, 0.0
        %v287 = vrot.slane %v286, 4
        %v288 = vadd.f32 %v286, %v287
        %v289 = vrot.slane %v288, 2
        %v290 = vadd.f32 %v288, %v289
        %v291 = vrot.slane %v290, 1
        %v292 = vadd.f32 %v290, %v291
        %v293 = vadd.f32 %v285, %v292
        %294 = vst [vmem:[%s215] sm:$0x1] %v293
        %s295 = sand.u32 %s98, 1
        %s296 = scalar_lea.sflag [#allocation4], %s295
        %s297 = sand.u32 %s98, 1
        %s298 = scalar_lea.vmem [#allocation7], %s297
        // Predicated region
        $region41: #{tpu_custom_call.1} parent=27 // pred_check
          %p299 = pneg %p108
        $region42: #{tpu_custom_call.1} parent=27 // pred_check_branch
          %301 = sbr.rel (%p299) target = $region44
        $region43: #{tpu_custom_call.1} parent=27 // pred_region
          %s303 = ssub.s32 16, 16
          %304 = vsyncadd %s296, %s303
          %s305 = smul.addr %s26, 16
          %s306 = scalar_lea.hbm %s2, %s305
          %s308 = sshll.u32 %s298, 4
          %s309 = int_to_ptr.vmem [resolvable:$true] %s308
          %311 = dma.vmem_to_hbm [thread:$0]  %s309, 16, %s306, %s296
        $region44: #{tpu_custom_call.1} parent=27 // pred_fallthru
          _
      $region28: #{tpu_custom_call.1} parent=5 // pred_fallthru
        _
      %p312 = scmp.le.s32.totalorder 2, %s17
      // Predicated region
      $region45: #{tpu_custom_call.1} parent=5 // pred_check
        %p313 = pneg %p312
      $region46: #{tpu_custom_call.1} parent=5 // pred_check_branch
        %315 = sbr.rel (%p313) target = $region48
      $region47: #{tpu_custom_call.1} parent=5 // pred_region
        %s316 = ssub.s32 %s17, 2
        // Predicated region
        $region49: #{tpu_custom_call.1} parent=47 // pred_check
          %p317 = pneg %p114
        $region50: #{tpu_custom_call.1} parent=47 // pred_check_branch
          %319 = sbr.rel (%p317) target = $region52
        $region51: #{tpu_custom_call.1} parent=47 // pred_region
          %s320 = sand.u32 %s99, 1
          %s321 = scalar_lea.sflag [#allocation4], %s320
          %s322 = sand.u32 %s99, 1
          %s323 = scalar_lea.vmem [#allocation7], %s322
          %324 = dma.done %s321, 16
        $region52: #{tpu_custom_call.1} parent=47 // pred_fallthru
          _
      $region48: #{tpu_custom_call.1} parent=5 // pred_fallthru
        _
    $region6: #{tpu_custom_call.1} parent=1 // loop_footer
      %s21 = sadd.s32 1, %s17
    $region7: #{tpu_custom_call.1} parent=1 // loop_footer_branch
      %16 = sbr.rel target = $region3
    $region8: #{tpu_custom_call.1} parent=1 // loop_exit
      _
    %325 = vsyncpa [#allocation3], 1
    %s326 = scalar_lea.sflag [#allocation3], 1
    %327 = vsyncpa %s326, 1
    %328 = vsyncpa [#allocation6], 1
    %s329 = scalar_lea.sflag [#allocation6], 1
    %330 = vsyncpa %s329, 1
    %331 = vsyncpa [#allocation4], 1
    %s332 = scalar_lea.sflag [#allocation4], 1
    %333 = vsyncpa %s332, 1

</llo_original>
